<compile_context>
chip_gen: v6e
topology: v6e:2x2x1
jax: 0.10.0
libtpu: 0.0.40
codegen_flags: <defaults>
</compile_context>

<pallas_src>
import jax
import jax.numpy as jnp
import numpy as np
from jax import lax
from jax.experimental import pallas as pl
from jax.experimental.pallas import tpu as pltpu


def _round_up(a, m):
    return (a + m - 1) // m * m


def _hw_kernel(s, mu):
    """Kernel body closed over static config (s, mu)."""
    contract_last = (((1,), (1,)), ((), ()))   # W @ X^T  (q @ k^T pattern)

    def kernel(x_ref, h_ref, dg_ref, w_ref, b_ref, eye_ref, o_ref, y_ref, hs_ref):
        # x_ref:(tn, 2*ln)  h_ref:(tn, s)  dg_ref:(1, tn)
        # w_ref:(s*s+s, 2*ln) fused + row-permuted  b_ref:(s*s+s, 1)  eye_ref:(s, s)
        # o_ref:(s, tn)   y_ref:(s*s+s, tn) scratch   hs_ref:(s, tn) scratch

        # Single fused MXU push over the natural-layout X block; result is
        # already lane-dense in N.  Stage in VMEM scratch (bounds vreg pressure).
        y_ref[...] = lax.dot_general(w_ref[...], x_ref[...], contract_last,
                                     preferred_element_type=jnp.float32)
        y_ref[...] = jnp.tanh(y_ref[...] + b_ref[...])           # one EUP pass

        # Lane-dense H^T via a tiny identity matmul (MXU has slack, result is
        # exact), then hoist the mu/s/dg scale onto the s-row tensor.
        h_t = lax.dot_general(eye_ref[...], h_ref[...], contract_last,
                              preferred_element_type=jnp.float32)  # (s, tn)
        hs_ref[...] = h_t * ((mu / s) / dg_ref[...])

        # out[i, n] = b_rou[n, i] + sum_j A[n, i, j] * Hs[n, j]
        # W rows were permuted to (j*s + i) order, so each j-slab is a
        # contiguous, sublane-aligned (s, tn) block (aligned because s == 8):
        # s lane-dense VPU FMAs accumulated into the output VMEM block,
        # no XLU reduces and no concatenates.
        o_ref[...] = y_ref[pl.ds(s * s, s), :]                    # rou term
        for j in range(s):
            o_ref[...] += y_ref[pl.ds(j * s, s), :] * hs_ref[pl.ds(j, 1), :]

    return kernel


def hw_forward(x, h, dg, wxi, bxi, wrou, brou, *, ln, s, mu=0.9, block_n=8192):
    """Pallas wrapper.
    x:(N,2*ln)  h:(N,s)  dg:(N,)
    wxi:(s*s,2*ln)  bxi:(s*s,)  wrou:(s,ln)  brou:(s,)   (nn.Linear layout)
    -> (N, s)
    """
    f32 = jnp.float32
    x = jnp.asarray(x, f32)
    h = jnp.asarray(h, f32)
    dg = jnp.asarray(dg, f32).reshape(1, -1)
    n = x.shape[0]

    # ---- fuse + row-permute the two Linear layers (trace-time, tiny) ----
    # New row order (j*s + i) makes each j-slab of the activation a contiguous
    # sublane-aligned block (exactly aligned because s == 8 here).
    wxi_p = jnp.asarray(wxi, f32).reshape(s, s, 2 * ln).swapaxes(0, 1).reshape(s * s, 2 * ln)
    bxi_p = jnp.asarray(bxi, f32).reshape(s, s).swapaxes(0, 1).reshape(s * s)
    wrou_pad = jnp.concatenate([jnp.asarray(wrou, f32), jnp.zeros((s, ln), f32)], axis=1)
    w_fused = jnp.concatenate([wxi_p, wrou_pad], axis=0)              # (s*s+s, 2*ln)
    b_fused = jnp.concatenate([bxi_p, jnp.asarray(brou, f32)]).reshape(s * s + s, 1)
    eye_s = jnp.eye(s, dtype=f32)

    # ---- tile size: big tiles amortize per-step overhead; guarantee >= 2
    # grid blocks when N allows so v7x's two TensorCores both get work ----
    block_n = _round_up(block_n, 128)
    n_lanes = _round_up(n, 128)
    tn = min(block_n, n_lanes)
    if n_lanes >= 2 * 128:
        tn = min(tn, _round_up((n_lanes + 1) // 2, 128))
    grid = (pl.cdiv(n, tn),)

    out_t = pl.pallas_call(
        _hw_kernel(s, mu),
        out_shape=jax.ShapeDtypeStruct((s, n), f32),
        grid=grid,
        in_specs=[
            pl.BlockSpec((tn, 2 * ln), lambda i: (i, 0)),          # X    (natural, streamed)
            pl.BlockSpec((tn, s), lambda i: (i, 0)),               # H    (natural, streamed)
            pl.BlockSpec((1, tn), lambda i: (0, i)),               # dg   (streamed)
            pl.BlockSpec((s * s + s, 2 * ln), lambda i: (0, 0)),   # W    (resident)
            pl.BlockSpec((s * s + s, 1), lambda i: (0, 0)),        # bias (resident)
            pl.BlockSpec((s, s), lambda i: (0, 0)),                # I_s  (resident)
        ],
        out_specs=pl.BlockSpec((s, tn), lambda i: (0, i)),
        scratch_shapes=[
            pltpu.VMEM((s * s + s, tn), f32),   # post-tanh activations
            pltpu.VMEM((s, tn), f32),           # scaled H^T
        ],
        compiler_params=pltpu.CompilerParams(
            dimension_semantics=("parallel",),  # v7x: shard row blocks over 2 TCs
        ),
    )(x, h, dg, w_fused, b_fused, eye_s)

    # Ragged tail: OOB lanes of the last block may contain garbage (incl.
    # inf/NaN from garbage dg) but lanes are independent and the OOB output
    # columns are masked on store, so the valid (s, n) result is exact.
    return out_t.T                                                   # (N, s)


def hw_reference(x, h, dg, wxi, bxi, wrou, brou, *, ln, s, mu=0.9):
    """Pure-JAX reference mirroring the PyTorch forward (weights in (out, in))."""
    xi = jnp.tanh(x @ wxi.T + bxi[None, :])                        # (N, s*s)
    a = xi.reshape(-1, s, s) * mu / s / dg.reshape(-1, 1, 1)       # (N, s, s)
    b = jnp.tanh(x[:, :ln] @ wrou.T + brou[None, :])               # (N, s)
    av = jnp.squeeze(jnp.matmul(a, h[:, :, None]), -1)             # (N, s)
    return av + b


if __name__ == "__main__":
    # Small shapes consistent with the module: ln=16, s=8.
    # N=200 (not a multiple of 128) exercises the masked tail block and the
    # >=2-block grid path.
    ln, s, mu = 16, 8, 0.9
    N = 200

    key = jax.random.PRNGKey(0)
    kx, kh, kdg, k1, k2, k3, k4 = jax.random.split(key, 7)

    x = jax.random.normal(kx, (N, 2 * ln), dtype=jnp.float32)
    h = jax.random.normal(kh, (N, s), dtype=jnp.float32)
    dg = jax.random.randint(kdg, (N,), 1, 6).astype(jnp.float32)   # degrees >= 1

    # nn.Linear layout: weight is (out_features, in_features).
    wxi = jax.random.normal(k1, (s * s, 2 * ln), dtype=jnp.float32) * 0.1
    bxi = jax.random.normal(k2, (s * s,), dtype=jnp.float32) * 0.1
    wrou = jax.random.normal(k3, (s, ln), dtype=jnp.float32) * 0.1
    brou = jax.random.normal(k4, (s,), dtype=jnp.float32) * 0.1

    out = hw_forward(x, h, dg, wxi, bxi, wrou, brou, ln=ln, s=s, mu=mu)
    out = jax.block_until_ready(out)

    ref = hw_reference(x, h, dg, wxi, bxi, wrou, brou, ln=ln, s=s, mu=mu)
    np.testing.assert_allclose(np.asarray(out), np.asarray(ref),
                               rtol=1e-4, atol=1e-4)
    print("KERNEL_OK")
</pallas_src>

<mosaic_0001>
module attributes {stable_mosaic.version = 11 : i64} {
  func.func @kernel(%arg0: i32, %arg1: memref<128x32xf32, #tpu.memory_space<vmem>>, %arg2: memref<128x8xf32, #tpu.memory_space<vmem>>, %arg3: memref<1x128xf32, #tpu.memory_space<vmem>>, %arg4: memref<72x32xf32, #tpu.memory_space<vmem>>, %arg5: memref<72x1xf32, #tpu.memory_space<vmem>>, %arg6: memref<8x8xf32, #tpu.memory_space<vmem>>, %arg7: memref<8x128xf32, #tpu.memory_space<vmem>>, %arg8: memref<72x128xf32, #tpu.memory_space<vmem>>, %arg9: memref<8x128xf32, #tpu.memory_space<vmem>>) attributes {dimension_semantics = [#tpu.dimension_semantics<parallel>], iteration_bounds = array<i64: 2>, scalar_prefetch = 0 : i64, scratch_operands = 2 : i64, tpu.core_type = #tpu.core_type<tc>, window_params = [{transform_indices = @transform_0, window_bounds = array<i64: 128, 32>}, {transform_indices = @transform_1, window_bounds = array<i64: 128, 8>}, {transform_indices = @transform_2, window_bounds = array<i64: 1, 128>}, {pipeline_mode = #tpu.pipeline_mode<synchronous>, transform_indices = @transform_3, window_bounds = array<i64: 72, 32>}, {pipeline_mode = #tpu.pipeline_mode<synchronous>, transform_indices = @transform_4, window_bounds = array<i64: 72, 1>}, {pipeline_mode = #tpu.pipeline_mode<synchronous>, transform_indices = @transform_5, window_bounds = array<i64: 8, 8>}, {transform_indices = @transform_6, window_bounds = array<i64: 8, 128>}]} {
    %c0 = arith.constant 0 : index
    %c0_0 = arith.constant 0 : index
    %0 = vector.load %arg4[%c0, %c0_0] : memref<72x32xf32, #tpu.memory_space<vmem>>, vector<72x32xf32>
    %c0_1 = arith.constant 0 : index
    %c0_2 = arith.constant 0 : index
    %1 = vector.load %arg1[%c0_1, %c0_2] : memref<128x32xf32, #tpu.memory_space<vmem>>, vector<128x32xf32>
    %cst = arith.constant dense<0.000000e+00> : vector<72x128xf32>
    %2 = tpu.matmul %0, %1, %cst {dimension_numbers = #tpu.dot_dimension_numbers<[1], [1], [0], [0], [0, 0, 1, 0], [], []>} : vector<72x32xf32>, vector<128x32xf32>, vector<72x128xf32> -> vector<72x128xf32>
    %c0_3 = arith.constant 0 : index
    %c0_4 = arith.constant 0 : index
    %3 = vector.load %arg8[%c0_3, %c0_4] : memref<72x128xf32, #tpu.memory_space<vmem>>, vector<72x128xf32>
    tpu.vector_store %arg8[%c0_3, %c0_4], %2 {strides = array<i32>} : memref<72x128xf32, #tpu.memory_space<vmem>>, vector<72x128xf32>,
    %c0_5 = arith.constant 0 : index
    %c0_6 = arith.constant 0 : index
    %4 = vector.load %arg8[%c0_5, %c0_6] : memref<72x128xf32, #tpu.memory_space<vmem>>, vector<72x128xf32>
    %c0_7 = arith.constant 0 : index
    %c0_8 = arith.constant 0 : index
    %5 = vector.load %arg5[%c0_7, %c0_8] : memref<72x1xf32, #tpu.memory_space<vmem>>, vector<72x1xf32>
    %6 = vector.broadcast %5 : vector<72x1xf32> to vector<72x128xf32>
    %7 = arith.addf %4, %6 : vector<72x128xf32>
    %8 = math.tanh %7 : vector<72x128xf32>
    %c0_9 = arith.constant 0 : index
    %c0_10 = arith.constant 0 : index
    %9 = vector.load %arg8[%c0_9, %c0_10] : memref<72x128xf32, #tpu.memory_space<vmem>>, vector<72x128xf32>
    tpu.vector_store %arg8[%c0_9, %c0_10], %8 {strides = array<i32>} : memref<72x128xf32, #tpu.memory_space<vmem>>, vector<72x128xf32>,
    %c0_11 = arith.constant 0 : index
    %c0_12 = arith.constant 0 : index
    %10 = vector.load %arg6[%c0_11, %c0_12] : memref<8x8xf32, #tpu.memory_space<vmem>>, vector<8x8xf32>
    %c0_13 = arith.constant 0 : index
    %c0_14 = arith.constant 0 : index
    %11 = vector.load %arg2[%c0_13, %c0_14] : memref<128x8xf32, #tpu.memory_space<vmem>>, vector<128x8xf32>
    %cst_15 = arith.constant dense<0.000000e+00> : vector<8x128xf32>
    %12 = tpu.matmul %10, %11, %cst_15 {dimension_numbers = #tpu.dot_dimension_numbers<[1], [1], [0], [0], [0, 0, 1, 0], [], []>} : vector<8x8xf32>, vector<128x8xf32>, vector<8x128xf32> -> vector<8x128xf32>
    %c0_16 = arith.constant 0 : index
    %c0_17 = arith.constant 0 : index
    %13 = vector.load %arg3[%c0_16, %c0_17] : memref<1x128xf32, #tpu.memory_space<vmem>>, vector<1x128xf32>
    %cst_18 = arith.constant 1.125000e-01 : f32
    %14 = vector.broadcast %cst_18 : f32 to vector<1x128xf32>
    %15 = arith.divf %14, %13 : vector<1x128xf32>
    %16 = vector.broadcast %15 : vector<1x128xf32> to vector<8x128xf32>
    %17 = arith.mulf %12, %16 : vector<8x128xf32>
    %c0_19 = arith.constant 0 : index
    %c0_20 = arith.constant 0 : index
    %18 = vector.load %arg9[%c0_19, %c0_20] : memref<8x128xf32, #tpu.memory_space<vmem>>, vector<8x128xf32>
    tpu.vector_store %arg9[%c0_19, %c0_20], %17 {strides = array<i32>} : memref<8x128xf32, #tpu.memory_space<vmem>>, vector<8x128xf32>,
    %c64 = arith.constant 64 : index
    %c0_21 = arith.constant 0 : index
    %19 = vector.load %arg8[%c64, %c0_21] : memref<72x128xf32, #tpu.memory_space<vmem>>, vector<8x128xf32>
    %c0_22 = arith.constant 0 : index
    %c0_23 = arith.constant 0 : index
    %20 = vector.load %arg7[%c0_22, %c0_23] : memref<8x128xf32, #tpu.memory_space<vmem>>, vector<8x128xf32>
    tpu.vector_store %arg7[%c0_22, %c0_23], %19 {strides = array<i32>} : memref<8x128xf32, #tpu.memory_space<vmem>>, vector<8x128xf32>,
    %c0_24 = arith.constant 0 : index
    %c0_25 = arith.constant 0 : index
    %21 = vector.load %arg7[%c0_24, %c0_25] : memref<8x128xf32, #tpu.memory_space<vmem>>, vector<8x128xf32>
    %c0_26 = arith.constant 0 : index
    %c0_27 = arith.constant 0 : index
    %22 = vector.load %arg8[%c0_26, %c0_27] : memref<72x128xf32, #tpu.memory_space<vmem>>, vector<8x128xf32>
    %c0_28 = arith.constant 0 : index
    %c0_29 = arith.constant 0 : index
    %23 = vector.load %arg9[%c0_28, %c0_29] : memref<8x128xf32, #tpu.memory_space<vmem>>, vector<1x128xf32>
    %24 = vector.broadcast %23 : vector<1x128xf32> to vector<8x128xf32>
    %25 = arith.mulf %22, %24 : vector<8x128xf32>
    %26 = arith.addf %21, %25 : vector<8x128xf32>
    %c0_30 = arith.constant 0 : index
    %c0_31 = arith.constant 0 : index
    %27 = vector.load %arg7[%c0_30, %c0_31] : memref<8x128xf32, #tpu.memory_space<vmem>>, vector<8x128xf32>
    tpu.vector_store %arg7[%c0_30, %c0_31], %26 {strides = array<i32>} : memref<8x128xf32, #tpu.memory_space<vmem>>, vector<8x128xf32>,
    %c0_32 = arith.constant 0 : index
    %c0_33 = arith.constant 0 : index
    %28 = vector.load %arg7[%c0_32, %c0_33] : memref<8x128xf32, #tpu.memory_space<vmem>>, vector<8x128xf32>
    %c8 = arith.constant 8 : index
    %c0_34 = arith.constant 0 : index
    %29 = vector.load %arg8[%c8, %c0_34] : memref<72x128xf32, #tpu.memory_space<vmem>>, vector<8x128xf32>
    %c1 = arith.constant 1 : index
    %c0_35 = arith.constant 0 : index
    %30 = vector.load %arg9[%c1, %c0_35] : memref<8x128xf32, #tpu.memory_space<vmem>>, vector<1x128xf32>
    %31 = vector.broadcast %30 : vector<1x128xf32> to vector<8x128xf32>
    %32 = arith.mulf %29, %31 : vector<8x128xf32>
    %33 = arith.addf %28, %32 : vector<8x128xf32>
    %c0_36 = arith.constant 0 : index
    %c0_37 = arith.constant 0 : index
    %34 = vector.load %arg7[%c0_36, %c0_37] : memref<8x128xf32, #tpu.memory_space<vmem>>, vector<8x128xf32>
    tpu.vector_store %arg7[%c0_36, %c0_37], %33 {strides = array<i32>} : memref<8x128xf32, #tpu.memory_space<vmem>>, vector<8x128xf32>,
    %c0_38 = arith.constant 0 : index
    %c0_39 = arith.constant 0 : index
    %35 = vector.load %arg7[%c0_38, %c0_39] : memref<8x128xf32, #tpu.memory_space<vmem>>, vector<8x128xf32>
    %c16 = arith.constant 16 : index
    %c0_40 = arith.constant 0 : index
    %36 = vector.load %arg8[%c16, %c0_40] : memref<72x128xf32, #tpu.memory_space<vmem>>, vector<8x128xf32>
    %c2 = arith.constant 2 : index
    %c0_41 = arith.constant 0 : index
    %37 = vector.load %arg9[%c2, %c0_41] : memref<8x128xf32, #tpu.memory_space<vmem>>, vector<1x128xf32>
    %38 = vector.broadcast %37 : vector<1x128xf32> to vector<8x128xf32>
    %39 = arith.mulf %36, %38 : vector<8x128xf32>
    %40 = arith.addf %35, %39 : vector<8x128xf32>
    %c0_42 = arith.constant 0 : index
    %c0_43 = arith.constant 0 : index
    %41 = vector.load %arg7[%c0_42, %c0_43] : memref<8x128xf32, #tpu.memory_space<vmem>>, vector<8x128xf32>
    tpu.vector_store %arg7[%c0_42, %c0_43], %40 {strides = array<i32>} : memref<8x128xf32, #tpu.memory_space<vmem>>, vector<8x128xf32>,
    %c0_44 = arith.constant 0 : index
    %c0_45 = arith.constant 0 : index
    %42 = vector.load %arg7[%c0_44, %c0_45] : memref<8x128xf32, #tpu.memory_space<vmem>>, vector<8x128xf32>
    %c24 = arith.constant 24 : index
    %c0_46 = arith.constant 0 : index
    %43 = vector.load %arg8[%c24, %c0_46] : memref<72x128xf32, #tpu.memory_space<vmem>>, vector<8x128xf32>
    %c3 = arith.constant 3 : index
    %c0_47 = arith.constant 0 : index
    %44 = vector.load %arg9[%c3, %c0_47] : memref<8x128xf32, #tpu.memory_space<vmem>>, vector<1x128xf32>
    %45 = vector.broadcast %44 : vector<1x128xf32> to vector<8x128xf32>
    %46 = arith.mulf %43, %45 : vector<8x128xf32>
    %47 = arith.addf %42, %46 : vector<8x128xf32>
    %c0_48 = arith.constant 0 : index
    %c0_49 = arith.constant 0 : index
    %48 = vector.load %arg7[%c0_48, %c0_49] : memref<8x128xf32, #tpu.memory_space<vmem>>, vector<8x128xf32>
    tpu.vector_store %arg7[%c0_48, %c0_49], %47 {strides = array<i32>} : memref<8x128xf32, #tpu.memory_space<vmem>>, vector<8x128xf32>,
    %c0_50 = arith.constant 0 : index
    %c0_51 = arith.constant 0 : index
    %49 = vector.load %arg7[%c0_50, %c0_51] : memref<8x128xf32, #tpu.memory_space<vmem>>, vector<8x128xf32>
    %c32 = arith.constant 32 : index
    %c0_52 = arith.constant 0 : index
    %50 = vector.load %arg8[%c32, %c0_52] : memref<72x128xf32, #tpu.memory_space<vmem>>, vector<8x128xf32>
    %c4 = arith.constant 4 : index
    %c0_53 = arith.constant 0 : index
    %51 = vector.load %arg9[%c4, %c0_53] : memref<8x128xf32, #tpu.memory_space<vmem>>, vector<1x128xf32>
    %52 = vector.broadcast %51 : vector<1x128xf32> to vector<8x128xf32>
    %53 = arith.mulf %50, %52 : vector<8x128xf32>
    %54 = arith.addf %49, %53 : vector<8x128xf32>
    %c0_54 = arith.constant 0 : index
    %c0_55 = arith.constant 0 : index
    %55 = vector.load %arg7[%c0_54, %c0_55] : memref<8x128xf32, #tpu.memory_space<vmem>>, vector<8x128xf32>
    tpu.vector_store %arg7[%c0_54, %c0_55], %54 {strides = array<i32>} : memref<8x128xf32, #tpu.memory_space<vmem>>, vector<8x128xf32>,
    %c0_56 = arith.constant 0 : index
    %c0_57 = arith.constant 0 : index
    %56 = vector.load %arg7[%c0_56, %c0_57] : memref<8x128xf32, #tpu.memory_space<vmem>>, vector<8x128xf32>
    %c40 = arith.constant 40 : index
    %c0_58 = arith.constant 0 : index
    %57 = vector.load %arg8[%c40, %c0_58] : memref<72x128xf32, #tpu.memory_space<vmem>>, vector<8x128xf32>
    %c5 = arith.constant 5 : index
    %c0_59 = arith.constant 0 : index
    %58 = vector.load %arg9[%c5, %c0_59] : memref<8x128xf32, #tpu.memory_space<vmem>>, vector<1x128xf32>
    %59 = vector.broadcast %58 : vector<1x128xf32> to vector<8x128xf32>
    %60 = arith.mulf %57, %59 : vector<8x128xf32>
    %61 = arith.addf %56, %60 : vector<8x128xf32>
    %c0_60 = arith.constant 0 : index
    %c0_61 = arith.constant 0 : index
    %62 = vector.load %arg7[%c0_60, %c0_61] : memref<8x128xf32, #tpu.memory_space<vmem>>, vector<8x128xf32>
    tpu.vector_store %arg7[%c0_60, %c0_61], %61 {strides = array<i32>} : memref<8x128xf32, #tpu.memory_space<vmem>>, vector<8x128xf32>,
    %c0_62 = arith.constant 0 : index
    %c0_63 = arith.constant 0 : index
    %63 = vector.load %arg7[%c0_62, %c0_63] : memref<8x128xf32, #tpu.memory_space<vmem>>, vector<8x128xf32>
    %c48 = arith.constant 48 : index
    %c0_64 = arith.constant 0 : index
    %64 = vector.load %arg8[%c48, %c0_64] : memref<72x128xf32, #tpu.memory_space<vmem>>, vector<8x128xf32>
    %c6 = arith.constant 6 : index
    %c0_65 = arith.constant 0 : index
    %65 = vector.load %arg9[%c6, %c0_65] : memref<8x128xf32, #tpu.memory_space<vmem>>, vector<1x128xf32>
    %66 = vector.broadcast %65 : vector<1x128xf32> to vector<8x128xf32>
    %67 = arith.mulf %64, %66 : vector<8x128xf32>
    %68 = arith.addf %63, %67 : vector<8x128xf32>
    %c0_66 = arith.constant 0 : index
    %c0_67 = arith.constant 0 : index
    %69 = vector.load %arg7[%c0_66, %c0_67] : memref<8x128xf32, #tpu.memory_space<vmem>>, vector<8x128xf32>
    tpu.vector_store %arg7[%c0_66, %c0_67], %68 {strides = array<i32>} : memref<8x128xf32, #tpu.memory_space<vmem>>, vector<8x128xf32>,
    %c0_68 = arith.constant 0 : index
    %c0_69 = arith.constant 0 : index
    %70 = vector.load %arg7[%c0_68, %c0_69] : memref<8x128xf32, #tpu.memory_space<vmem>>, vector<8x128xf32>
    %c56 = arith.constant 56 : index
    %c0_70 = arith.constant 0 : index
    %71 = vector.load %arg8[%c56, %c0_70] : memref<72x128xf32, #tpu.memory_space<vmem>>, vector<8x128xf32>
    %c7 = arith.constant 7 : index
    %c0_71 = arith.constant 0 : index
    %72 = vector.load %arg9[%c7, %c0_71] : memref<8x128xf32, #tpu.memory_space<vmem>>, vector<1x128xf32>
    %73 = vector.broadcast %72 : vector<1x128xf32> to vector<8x128xf32>
    %74 = arith.mulf %71, %73 : vector<8x128xf32>
    %75 = arith.addf %70, %74 : vector<8x128xf32>
    %c0_72 = arith.constant 0 : index
    %c0_73 = arith.constant 0 : index
    %76 = vector.load %arg7[%c0_72, %c0_73] : memref<8x128xf32, #tpu.memory_space<vmem>>, vector<8x128xf32>
    tpu.vector_store %arg7[%c0_72, %c0_73], %75 {strides = array<i32>} : memref<8x128xf32, #tpu.memory_space<vmem>>, vector<8x128xf32>,
    return
  }
  func.func @transform_0(%arg0: i32) -> (i32, i32) {
    %c0_i32 = arith.constant 0 : i32
    %c0_i32_0 = arith.constant 0 : i32
    return %arg0, %c0_i32 : i32, i32
  }
  func.func @transform_1(%arg0: i32) -> (i32, i32) {
    %c0_i32 = arith.constant 0 : i32
    %c0_i32_0 = arith.constant 0 : i32
    return %arg0, %c0_i32 : i32, i32
  }
  func.func @transform_2(%arg0: i32) -> (i32, i32) {
    %c0_i32 = arith.constant 0 : i32
    %c0_i32_0 = arith.constant 0 : i32
    return %c0_i32, %arg0 : i32, i32
  }
  func.func @transform_3(%arg0: i32) -> (i32, i32) {
    %c0_i32 = arith.constant 0 : i32
    %c0_i32_0 = arith.constant 0 : i32
    %c0_i32_1 = arith.constant 0 : i32
    return %c0_i32, %c0_i32_0 : i32, i32
  }
  func.func @transform_4(%arg0: i32) -> (i32, i32) {
    %c0_i32 = arith.constant 0 : i32
    %c0_i32_0 = arith.constant 0 : i32
    %c0_i32_1 = arith.constant 0 : i32
    return %c0_i32, %c0_i32_0 : i32, i32
  }
  func.func @transform_5(%arg0: i32) -> (i32, i32) {
    %c0_i32 = arith.constant 0 : i32
    %c0_i32_0 = arith.constant 0 : i32
    %c0_i32_1 = arith.constant 0 : i32
    return %c0_i32, %c0_i32_0 : i32, i32
  }
  func.func @transform_6(%arg0: i32) -> (i32, i32) {
    %c0_i32 = arith.constant 0 : i32
    %c0_i32_0 = arith.constant 0 : i32
    return %c0_i32, %arg0 : i32, i32
  }
}

</mosaic_0001>

<llo_original>
// kernel: tpu_custom_call.1
$region0: #{tpu_custom_call.1}
  #allocation0 [shape = 'u32[]', space=smem, size = 0x4, offset = 0x4, fixed_abs, tag = 'smem constant byte address 0x4 - core index']
  #allocation1 [shape = 'u32[144,128]{1,0:T(1,128)}', space=vmem, size = 0x12000, scoped, tag = 'internal scratch']
  #allocation2 [shape = 'f32[72,128]{1,0:T(8,128)}', space=vmem, size = 0x9000, scoped, tag = 'scratch operand']
  #allocation3 [shape = 'f32[8,128]{1,0:T(8,128)}', space=vmem, size = 0x1000, scoped, tag = 'scratch operand']
  %s0 = inlined_call_operand.vmem [shape: f32[200,32], index: 0, kind: input, shape index: {}]
  %s1 = inlined_call_operand.vmem [shape: f32[200,8], index: 1, kind: input, shape index: {}]
  %s2 = inlined_call_operand.vmem [shape: f32[1,200], index: 2, kind: input, shape index: {}]
  %s3 = inlined_call_operand.vmem [shape: f32[72,32], index: 3, kind: input, shape index: {}]
  %s4 = inlined_call_operand.vmem [shape: f32[72,1], index: 4, kind: input, shape index: {}]
  %s5 = inlined_call_operand.vmem [shape: f32[8,8], index: 5, kind: input, shape index: {}]
  %s6 = inlined_call_operand.hbm [shape: f32[8,200], index: 6, kind: output, shape index: {}]
  %s7 = sld [smem:[#allocation0]]
  $region57: #{tpu_custom_call.1} parent=0
    _
  %s9 = ssub.s32 1, %s7
  %s10 = scalar_select 0, %s9, %s7
  $region1: #{tpu_custom_call.1} parent=0
    #allocation4 [shape = 'u8[8192]{0}', space=vmem, size = 0x2000, scoped, tag = 'output window, operand 0']
    #allocation5 [shape = 's32[2]{0}', space=sflag, size = 0x8, scoped, tag = 'scoped memory for tpu_custom_call.1']
    %11 = vsyncpa [#allocation5], 0
    %s12 = scalar_lea.sflag [#allocation5], 1
    %13 = vsyncpa %s12, 0
    loop: start=0, step=1, limit=4
    $region2: #{tpu_custom_call.1} parent=1 // loop_pre_header
      _
    $region3: #{tpu_custom_call.1} parent=1 // loop_header
      %s15 = sphi 0, %s19
      %p16 = scmp.ge.s32.totalorder %s15, 4
      %s25 = sphi 0, %s27
      %s28 = sphi 0, %s25
      %s29 = sphi 0, %s28
      %s45 = sphi 0, %s29
      %s51 = sphi 0, %s53
      %s54 = sphi 0, %s51
      %s55 = sphi 0, %s54
      %s71 = sphi 0, %s55
      %s77 = sphi 0, %s79
      %s80 = sphi 0, %s77
      %s81 = sphi 0, %s80
      %s97 = sphi 0, %s81
      %s101 = sphi 0, %s101
      %s103 = sphi 0, %s101
      %s104 = sphi 0, %s103
      %s118 = sphi 0, %s104
      %s122 = sphi 0, %s122
      %s124 = sphi 0, %s122
      %s125 = sphi 0, %s124
      %s139 = sphi 0, %s125
      %s143 = sphi 0, %s143
      %s145 = sphi 0, %s143
      %s146 = sphi 0, %s145
      %s160 = sphi 0, %s146
      %s166 = sphi 0, %s168
      %s169 = sphi 0, %s166
      %s170 = sphi 0, %s169
      %s186 = sphi 0, %s170
    $region4: #{tpu_custom_call.1} parent=1 // loop_header_branch
      %18 = sbr.rel (%p16) target = $region8
    $region5: #{tpu_custom_call.1} parent=1 // loop_body
      %s20 = ssub.s32 %s15, 1
      %s21 = ssub.s32 %s15, 2
      %s22 = sadd.s32 %s15, 1
      %s23 = ssub.s32 %s15, %s22
      %p24 = scmp.eq.s32.totalorder %s23, 0
      %s26 = sadd.s32 %s25, 1
      %s27 = scalar_select %p24, %s25, %s26
      %p30 = pneg %p24
      %p31 = scmp.eq.s32.totalorder %s15, 1
      %p32 = por %p30, %p31
      %p33 = scmp.ne.s32.totalorder %s25, %s28
      %p34 = scmp.eq.s32.totalorder %s15, 0
      %p35 = por %p33, %p34
      %p36 = scmp.ne.s32.totalorder %s25, %s28
      %p37 = scmp.eq.s32.totalorder %s20, 1
      %p38 = por %p36, %p37
      %p39 = scmp.ne.s32.totalorder %s28, %s29
      %p40 = scmp.eq.s32.totalorder %s20, 0
      %p41 = por %p39, %p40
      %p42 = scmp.ne.s32.totalorder %s28, %s29
      %p43 = scmp.eq.s32.totalorder %s21, 1
      %p44 = por %p42, %p43
      %p46 = scmp.ne.s32.totalorder %s29, %s45
      %p47 = scmp.eq.s32.totalorder %s21, 0
      %p48 = por %p46, %p47
      %s49 = ssub.s32 %s15, %s22
      %p50 = scmp.eq.s32.totalorder %s49, 0
      %s52 = sadd.s32 %s51, 1
      %s53 = scalar_select %p50, %s51, %s52
      %p56 = pneg %p50
      %p57 = scmp.eq.s32.totalorder %s15, 1
      %p58 = por %p56, %p57
      %p59 = scmp.ne.s32.totalorder %s51, %s54
      %p60 = scmp.eq.s32.totalorder %s15, 0
      %p61 = por %p59, %p60
      %p62 = scmp.ne.s32.totalorder %s51, %s54
      %p63 = scmp.eq.s32.totalorder %s20, 1
      %p64 = por %p62, %p63
      %p65 = scmp.ne.s32.totalorder %s54, %s55
      %p66 = scmp.eq.s32.totalorder %s20, 0
      %p67 = por %p65, %p66
      %p68 = scmp.ne.s32.totalorder %s54, %s55
      %p69 = scmp.eq.s32.totalorder %s21, 1
      %p70 = por %p68, %p69
      %p72 = scmp.ne.s32.totalorder %s55, %s71
      %p73 = scmp.eq.s32.totalorder %s21, 0
      %p74 = por %p72, %p73
      %s75 = ssub.s32 %s15, %s22
      %p76 = scmp.eq.s32.totalorder %s75, 0
      %s78 = sadd.s32 %s77, 1
      %s79 = scalar_select %p76, %s77, %s78
      %p82 = pneg %p76
      %p83 = scmp.eq.s32.totalorder %s15, 1
      %p84 = por %p82, %p83
      %p85 = scmp.ne.s32.totalorder %s77, %s80
      %p86 = scmp.eq.s32.totalorder %s15, 0
      %p87 = por %p85, %p86
      %p88 = scmp.ne.s32.totalorder %s77, %s80
      %p89 = scmp.eq.s32.totalorder %s20, 1
      %p90 = por %p88, %p89
      %p91 = scmp.ne.s32.totalorder %s80, %s81
      %p92 = scmp.eq.s32.totalorder %s20, 0
      %p93 = por %p91, %p92
      %p94 = scmp.ne.s32.totalorder %s80, %s81
      %p95 = scmp.eq.s32.totalorder %s21, 1
      %p96 = por %p94, %p95
      %p98 = scmp.ne.s32.totalorder %s81, %s97
      %p99 = scmp.eq.s32.totalorder %s21, 0
      %p100 = por %p98, %p99
      %s102 = sadd.s32 %s101, 1
      %p105 = scmp.eq.s32.totalorder %s15, 1
      %p106 = scmp.ne.s32.totalorder %s101, %s103
      %p107 = scmp.eq.s32.totalorder %s15, 0
      %p108 = por %p106, %p107
      %p109 = scmp.ne.s32.totalorder %s101, %s103
      %p110 = scmp.eq.s32.totalorder %s20, 1
      %p111 = por %p109, %p110
      %p112 = scmp.ne.s32.totalorder %s103, %s104
      %p113 = scmp.eq.s32.totalorder %s20, 0
      %p114 = por %p112, %p113
      %p115 = scmp.ne.s32.totalorder %s103, %s104
      %p116 = scmp.eq.s32.totalorder %s21, 1
      %p117 = por %p115, %p116
      %p119 = scmp.ne.s32.totalorder %s104, %s118
      %p120 = scmp.eq.s32.totalorder %s21, 0
      %p121 = por %p119, %p120
      %s123 = sadd.s32 %s122, 1
      %p126 = scmp.eq.s32.totalorder %s15, 1
      %p127 = scmp.ne.s32.totalorder %s122, %s124
      %p128 = scmp.eq.s32.totalorder %s15, 0
      %p129 = por %p127, %p128
      %p130 = scmp.ne.s32.totalorder %s122, %s124
      %p131 = scmp.eq.s32.totalorder %s20, 1
      %p132 = por %p130, %p131
      %p133 = scmp.ne.s32.totalorder %s124, %s125
      %p134 = scmp.eq.s32.totalorder %s20, 0
      %p135 = por %p133, %p134
      %p136 = scmp.ne.s32.totalorder %s124, %s125
      %p137 = scmp.eq.s32.totalorder %s21, 1
      %p138 = por %p136, %p137
      %p140 = scmp.ne.s32.totalorder %s125, %s139
      %p141 = scmp.eq.s32.totalorder %s21, 0
      %p142 = por %p140, %p141
      %s144 = sadd.s32 %s143, 1
      %p147 = scmp.eq.s32.totalorder %s15, 1
      %p148 = scmp.ne.s32.totalorder %s143, %s145
      %p149 = scmp.eq.s32.totalorder %s15, 0
      %p150 = por %p148, %p149
      %p151 = scmp.ne.s32.totalorder %s143, %s145
      %p152 = scmp.eq.s32.totalorder %s20, 1
      %p153 = por %p151, %p152
      %p154 = scmp.ne.s32.totalorder %s145, %s146
      %p155 = scmp.eq.s32.totalorder %s20, 0
      %p156 = por %p154, %p155
      %p157 = scmp.ne.s32.totalorder %s145, %s146
      %p158 = scmp.eq.s32.totalorder %s21, 1
      %p159 = por %p157, %p158
      %p161 = scmp.ne.s32.totalorder %s146, %s160
      %p162 = scmp.eq.s32.totalorder %s21, 0
      %p163 = por %p161, %p162
      %s164 = ssub.s32 %s15, %s22
      %p165 = scmp.eq.s32.totalorder %s164, 0
      %s167 = sadd.s32 %s166, 1
      %s168 = scalar_select %p165, %s166, %s167
      %p171 = pneg %p165
      %p172 = scmp.eq.s32.totalorder %s15, 1
      %p173 = por %p171, %p172
      %p174 = scmp.ne.s32.totalorder %s166, %s169
      %p175 = scmp.eq.s32.totalorder %s15, 0
      %p176 = por %p174, %p175
      %p177 = scmp.ne.s32.totalorder %s166, %s169
      %p178 = scmp.eq.s32.totalorder %s20, 1
      %p179 = por %p177, %p178
      %p180 = scmp.ne.s32.totalorder %s169, %s170
      %p181 = scmp.eq.s32.totalorder %s20, 0
      %p182 = por %p180, %p181
      %p183 = scmp.ne.s32.totalorder %s169, %s170
      %p184 = scmp.eq.s32.totalorder %s21, 1
      %p185 = por %p183, %p184
      %p187 = scmp.ne.s32.totalorder %s170, %s186
      %p188 = scmp.eq.s32.totalorder %s21, 0
      %p189 = por %p187, %p188
      %p190 = scmp.le.s32.totalorder 1, %s15
      %p191 = scmp.lt.s32.totalorder %s15, 3
      %p192 = pnand %p190, %p191
      %p193 = pneg %p192
      // Predicated region
      $region9: #{tpu_custom_call.1} parent=5 // pred_check
        _
      $region10: #{tpu_custom_call.1} parent=5 // pred_check_branch
        %195 = sbr.rel (%p192) target = $region12
      $region11: #{tpu_custom_call.1} parent=5 // pred_region
        %s196 = ssub.s32 %s15, 1
        // Predicated region
        $region13: #{tpu_custom_call.1} parent=11 // pred_check
          %p197 = pneg %p114
        $region14: #{tpu_custom_call.1} parent=11 // pred_check_branch
          %199 = sbr.rel (%p197) target = $region16
        $region15: #{tpu_custom_call.1} parent=11 // pred_region
          _
        $region16: #{tpu_custom_call.1} parent=11 // pred_fallthru
          _
        // Predicated region
        $region17: #{tpu_custom_call.1} parent=11 // pred_check
          %p200 = pneg %p135
        $region18: #{tpu_custom_call.1} parent=11 // pred_check_branch
          %202 = sbr.rel (%p200) target = $region20
        $region19: #{tpu_custom_call.1} parent=11 // pred_region
          _
        $region20: #{tpu_custom_call.1} parent=11 // pred_fallthru
          _
        // Predicated region
        $region21: #{tpu_custom_call.1} parent=11 // pred_check
          %p203 = pneg %p156
        $region22: #{tpu_custom_call.1} parent=11 // pred_check_branch
          %205 = sbr.rel (%p203) target = $region24
        $region23: #{tpu_custom_call.1} parent=11 // pred_region
          _
        $region24: #{tpu_custom_call.1} parent=11 // pred_fallthru
          _
      $region12: #{tpu_custom_call.1} parent=5 // pred_fallthru
        _
      %p206 = scmp.lt.s32.totalorder %s15, 2
      // Predicated region
      $region25: #{tpu_custom_call.1} parent=5 // pred_check
        %p207 = pneg %p206
      $region26: #{tpu_custom_call.1} parent=5 // pred_check_branch
        %209 = sbr.rel (%p207) target = $region28
      $region27: #{tpu_custom_call.1} parent=5 // pred_region
        // Predicated region
        $region29: #{tpu_custom_call.1} parent=27 // pred_check
          %p210 = pneg %p35
        $region30: #{tpu_custom_call.1} parent=27 // pred_check_branch
          %212 = sbr.rel (%p210) target = $region32
        $region31: #{tpu_custom_call.1} parent=27 // pred_region
          %s213 = smul.u32 16, %s15
          %s214 = ssub.s32 25, %s213
          %p215 = scmp.lt.s32.totalorder %s214, 16
          %s216 = scalar_select %p215, %s214, 16
          %s217 = smul.u32 128, %s216
          %p218 = scmp.lt.s32.totalorder %s213, 24
          %s219 = scalar_select %p218, %s213, 24
          %s220 = smul.addr %s219, 8
          %s221 = scalar_lea.vmem %s0, %s220
          %s222 = smul.u32 16, %s15
          %s223 = ssub.s32 25, %s222
          %p224 = scmp.lt.s32.totalorder %s223, 16
          %s225 = scalar_select %p224, %s223, 16
          %s226 = smul.u32 128, %s225
        $region32: #{tpu_custom_call.1} parent=27 // pred_fallthru
          _
        // Predicated region
        $region33: #{tpu_custom_call.1} parent=27 // pred_check
          %p227 = pneg %p61
        $region34: #{tpu_custom_call.1} parent=27 // pred_check_branch
          %229 = sbr.rel (%p227) target = $region36
        $region35: #{tpu_custom_call.1} parent=27 // pred_region
          %s230 = smul.u32 16, %s15
          %s231 = ssub.s32 25, %s230
          %p232 = scmp.lt.s32.totalorder %s231, 16
          %s233 = scalar_select %p232, %s231, 16
          %s234 = smul.u32 128, %s233
          %p235 = scmp.lt.s32.totalorder %s230, 24
          %s236 = scalar_select %p235, %s230, 24
          %s237 = smul.addr %s236, 8
          %s238 = scalar_lea.vmem %s1, %s237
          %s239 = smul.u32 16, %s15
          %s240 = ssub.s32 25, %s239
          %p241 = scmp.lt.s32.totalorder %s240, 16
          %s242 = scalar_select %p241, %s240, 16
          %s243 = smul.u32 128, %s242
        $region36: #{tpu_custom_call.1} parent=27 // pred_fallthru
          _
        // Predicated region
        $region37: #{tpu_custom_call.1} parent=27 // pred_check
          %p244 = pneg %p87
        $region38: #{tpu_custom_call.1} parent=27 // pred_check_branch
          %246 = sbr.rel (%p244) target = $region40
        $region39: #{tpu_custom_call.1} parent=27 // pred_region
          %p247 = scmp.lt.s32.totalorder %s15, 1
          %s248 = scalar_select %p247, %s15, 1
          %s249 = scalar_lea.vmem %s2, %s248
        $region40: #{tpu_custom_call.1} parent=27 // pred_fallthru
          _
      $region28: #{tpu_custom_call.1} parent=5 // pred_fallthru
        _
      %p250 = scmp.le.s32.totalorder 1, %s15
      %p251 = scmp.lt.s32.totalorder %s15, 3
      %p252 = pnand %p250, %p251
      %p253 = pneg %p252
      // Predicated region
      $region41: #{tpu_custom_call.1} parent=5 // pred_check
        _
      $region42: #{tpu_custom_call.1} parent=5 // pred_check_branch
        %255 = sbr.rel (%p252) target = $region44
      $region43: #{tpu_custom_call.1} parent=5 // pred_region
        %s256 = ssub.s32 %s15, 1
        %s257 = smul.u32 16, %s20
        %s258 = ssub.s32 25, %s257
        %p259 = scmp.lt.s32.totalorder %s258, 16
        %s260 = scalar_select %p259, %s258, 16
        %s261 = smul.u32 128, %s260
        %p262 = scmp.lt.s32.totalorder %s257, 24
        %s263 = scalar_select %p262, %s257, 24
        %s264 = smul.addr %s263, 8
        %s265 = scalar_lea.vmem %s0, %s264
        %p266 = pneg %p41
        %p267 = pneg %p38
        %s268 = smul.u32 16, %s20
        %s269 = ssub.s32 25, %s268
        %p270 = scmp.lt.s32.totalorder %s269, 16
        %s271 = scalar_select %p270, %s269, 16
        %s272 = smul.u32 128, %s271
        %p273 = scmp.lt.s32.totalorder %s268, 24
        %s274 = scalar_select %p273, %s268, 24
        %s275 = smul.addr %s274, 8
        %s276 = scalar_lea.vmem %s1, %s275
        %p277 = pneg %p67
        %p278 = pneg %p64
        %p279 = scmp.lt.s32.totalorder %s20, 1
        %s280 = scalar_select %p279, %s20, 1
        %s281 = scalar_lea.vmem %s2, %s280
        %p282 = pneg %p93
        %p283 = pneg %p90
        %p284 = pneg %p114
        %p285 = pneg %p111
        %p286 = pneg %p135
        %p287 = pneg %p132
        %p288 = pneg %p156
        %p289 = pneg %p153
        %p290 = pneg %p182
        %p291 = pneg %p179
        %s292 = sand.u32 %s169, 1
        %s293 = scalar_lea.sflag [#allocation5], %s292
        %s294 = sand.u32 %s169, 1
        %s295 = smul.addr %s294, 8
        %s296 = scalar_lea.vmem [#allocation4], %s295
        %s297 = smul.u32 16, %s20
        %s298 = ssub.s32 25, %s297
        %p299 = scmp.lt.s32.totalorder %s298, 16
        %s300 = scalar_select %p299, %s298, 16
        %s301 = smul.u32 128, %s300
        %p302 = scmp.lt.s32.totalorder %s297, 24
        %s303 = scalar_select %p302, %s297, 24
        %s304 = smul.addr %s303, 8
        %s305 = scalar_lea.vmem %s0, %s304
        %s306 = smul.u32 16, %s20
        %s307 = ssub.s32 25, %s306
        %p308 = scmp.lt.s32.totalorder %s307, 16
        %s309 = scalar_select %p308, %s307, 16
        %s310 = smul.u32 128, %s309
        %s311 = smul.u32 16, %s20
        %s312 = ssub.s32 25, %s311
        %p313 = scmp.lt.s32.totalorder %s312, 16
        %s314 = scalar_select %p313, %s312, 16
        %s315 = smul.u32 128, %s314
        %p316 = scmp.lt.s32.totalorder %s311, 24
        %s317 = scalar_select %p316, %s311, 24
        %s318 = smul.addr %s317, 8
        %s319 = scalar_lea.vmem %s1, %s318
        %s320 = smul.u32 16, %s20
        %s321 = ssub.s32 25, %s320
        %p322 = scmp.lt.s32.totalorder %s321, 16
        %s323 = scalar_select %p322, %s321, 16
        %s324 = smul.u32 128, %s323
        %p325 = scmp.lt.s32.totalorder %s20, 1
        %s326 = scalar_select %p325, %s20, 1
        %s327 = scalar_lea.vmem %s2, %s326
        %v328 = vld [vmem:[%s3] sm:$0xff]
        %v329 = vld [vmem:[%s3 + $0x8] sm:$0xff]
        %v330 = vld [vmem:[%s3 + $0x10] sm:$0xff]
        %v331 = vld [vmem:[%s3 + $0x18] sm:$0xff]
        %v332 = vld [vmem:[%s3 + $0x20] sm:$0xff]
        %v333 = vld [vmem:[%s3 + $0x28] sm:$0xff]
        %v334 = vld [vmem:[%s3 + $0x30] sm:$0xff]
        %v335 = vld [vmem:[%s3 + $0x38] sm:$0xff]
        %v336 = vld [vmem:[%s3 + $0x40] sm:$0xff]
        %v337 = vld [vmem:[%s305] sm:$0xff]
        %v338 = vld [vmem:[%s305 + $0x8] sm:$0xff]
        %v339 = vld [vmem:[%s305 + $0x10] sm:$0xff]
        %v340 = vld [vmem:[%s305 + $0x18] sm:$0xff]
        %v341 = vld [vmem:[%s305 + $0x20] sm:$0xff]
        %v342 = vld [vmem:[%s305 + $0x28] sm:$0xff]
        %v343 = vld [vmem:[%s305 + $0x30] sm:$0xff]
        %v344 = vld [vmem:[%s305 + $0x38] sm:$0xff]
        %v345 = vld [vmem:[%s305 + $0x40] sm:$0xff]
        %v346 = vld [vmem:[%s305 + $0x48] sm:$0xff]
        %v347 = vld [vmem:[%s305 + $0x50] sm:$0xff]
        %v348 = vld [vmem:[%s305 + $0x58] sm:$0xff]
        %v349 = vld [vmem:[%s305 + $0x60] sm:$0xff]
        %v350 = vld [vmem:[%s305 + $0x68] sm:$0xff]
        %v351 = vld [vmem:[%s305 + $0x70] sm:$0xff]
        %v352 = vld [vmem:[%s305 + $0x78] sm:$0xff]
        %vm353 = vcmask 261120
        %v355 = vsel %vm353, %v328, 0
        %v358 = vsel %vm353, %v329, 0
        %v361 = vsel %vm353, %v330, 0
        %v364 = vsel %vm353, %v331, 0
        %v367 = vsel %vm353, %v332, 0
        %v370 = vsel %vm353, %v333, 0
        %v373 = vsel %vm353, %v334, 0
        %v376 = vsel %vm353, %v335, 0
        %v379 = vsel %vm353, %v336, 0
        %v382 = vsel %vm353, %v337, 0
        %v385 = vsel %vm353, %v338, 0
        %v388 = vsel %vm353, %v339, 0
        %v391 = vsel %vm353, %v340, 0
        %v394 = vsel %vm353, %v341, 0
        %v397 = vsel %vm353, %v342, 0
        %v400 = vsel %vm353, %v343, 0
        %v403 = vsel %vm353, %v344, 0
        %v406 = vsel %vm353, %v345, 0
        %v409 = vsel %vm353, %v346, 0
        %v412 = vsel %vm353, %v347, 0
        %v415 = vsel %vm353, %v348, 0
        %v418 = vsel %vm353, %v349, 0
        %v421 = vsel %vm353, %v350, 0
        %v424 = vsel %vm353, %v351, 0
        %v427 = vsel %vm353, %v352, 0
        %429 = vmatprep.subr.mxu0 0.0
        %430 = vmatpush1.xpose.msra.mxu0 %v427
        %431 = vmatprep.subr.mxu0 0.0
        %432 = vmatpush1.xpose.msra.mxu0 %v424
        %433 = vmatprep.subr.mxu0 0.0
        %434 = vmatpush1.xpose.msra.mxu0 %v421
        %435 = vmatprep.subr.mxu0 0.0
        %436 = vmatpush1.xpose.msra.mxu0 %v418
        %437 = vmatprep.subr.mxu0 0.0
        %438 = vmatpush1.xpose.msra.mxu0 %v415
        %439 = vmatprep.subr.mxu0 0.0
        %440 = vmatpush1.xpose.msra.mxu0 %v412
        %441 = vmatprep.subr.mxu0 0.0
        %442 = vmatpush1.xpose.msra.mxu0 %v409
        %443 = vmatprep.subr.mxu0 0.0
        %444 = vmatpush1.xpose.msra.mxu0 %v406
        %445 = vmatprep.subr.mxu0 0.0
        %446 = vmatpush1.xpose.msra.mxu0 %v403
        %447 = vmatprep.subr.mxu0 0.0
        %448 = vmatpush1.xpose.msra.mxu0 %v400
        %449 = vmatprep.subr.mxu0 0.0
        %450 = vmatpush1.xpose.msra.mxu0 %v397
        %451 = vmatprep.subr.mxu0 0.0
        %452 = vmatpush1.xpose.msra.mxu0 %v394
        %453 = vmatprep.subr.mxu0 0.0
        %454 = vmatpush1.xpose.msra.mxu0 %v391
        %455 = vmatprep.subr.mxu0 0.0
        %456 = vmatpush1.xpose.msra.mxu0 %v388
        %457 = vmatprep.subr.mxu0 0.0
        %458 = vmatpush1.xpose.msra.mxu0 %v385
        %459 = vmatprep.subr.mxu0 0.0
        %460 = vmatpush1.xpose.msra.mxu0 %v382
        %461 = vmatprep.subr.mxu0 0.0
        %462 = vmatpush2.xpose.msra.mxu0 0.0
        %463 = vmatprep.subr.mxu0 0.0
        %464 = vmatpush2.xpose.msra.mxu0 0.0
        %465 = vmatprep.subr.mxu0 0.0
        %466 = vmatpush2.xpose.msra.mxu0 0.0
        %467 = vmatprep.subr.mxu0 0.0
        %468 = vmatpush2.xpose.msra.mxu0 0.0
        %469 = vmatprep.subr.mxu0 0.0
        %470 = vmatpush2.xpose.msra.mxu0 0.0
        %471 = vmatprep.subr.mxu0 0.0
        %472 = vmatpush2.xpose.msra.mxu0 0.0
        %473 = vmatprep.subr.mxu0 0.0
        %474 = vmatpush2.xpose.msra.mxu0 0.0
        %475 = vmatprep.subr.mxu0 0.0
        %476 = vmatpush2.xpose.msra.mxu0 0.0
        %477 = vmatprep.subr.mxu0 0.0
        %478 = vmatpush2.xpose.msra.mxu0 0.0
        %479 = vmatprep.subr.mxu0 0.0
        %480 = vmatpush2.xpose.msra.mxu0 0.0
        %481 = vmatprep.subr.mxu0 0.0
        %482 = vmatpush2.xpose.msra.mxu0 0.0
        %483 = vmatprep.subr.mxu0 0.0
        %484 = vmatpush2.xpose.msra.mxu0 0.0
        %485 = vmatprep.subr.mxu0 0.0
        %486 = vmatpush2.xpose.msra.mxu0 0.0
        %487 = vmatprep.subr.mxu0 0.0
        %488 = vmatpush2.xpose.msra.mxu0 0.0
        %489 = vmatprep.subr.mxu0 0.0
        %490 = vmatpush2.xpose.msra.mxu0 0.0
        %491 = vmatprep.subr.mxu0 0.0
        %492 = vmatpush2.xpose.msra.mxu0 0.0
        %493 = vmatprep.mubr.f32.mxu0 0.0
        %494 = vmatmul.mubr.f32.gmra.mxu0 %v355
        %v495 = vpop.f32.mrf.mxu0
        %v496 = vadd.f32 0.0, %v495
        %v497 = vpop.f32.mrf.mxu0
        %498 = vmatprep.mubr.f32.mxu0 0.0
        %499 = vmatmul.mubr.f32.gmra.mxu0 %v358
        %v500 = vpop.f32.mrf.mxu0
        %v501 = vadd.f32 0.0, %v500
        %v502 = vpop.f32.mrf.mxu0
        %503 = vmatprep.mubr.f32.mxu0 0.0
        %504 = vmatmul.mubr.f32.gmra.mxu0 %v361
        %v505 = vpop.f32.mrf.mxu0
        %v506 = vadd.f32 0.0, %v505
        %v507 = vpop.f32.mrf.mxu0
        %508 = vmatprep.mubr.f32.mxu0 0.0
        %509 = vmatmul.mubr.f32.gmra.mxu0 %v364
        %v510 = vpop.f32.mrf.mxu0
        %v511 = vadd.f32 0.0, %v510
        %v512 = vpop.f32.mrf.mxu0
        %513 = vmatprep.mubr.f32.mxu0 0.0
        %514 = vmatmul.mubr.f32.gmra.mxu0 %v367
        %v515 = vpop.f32.mrf.mxu0
        %v516 = vadd.f32 0.0, %v515
        %v517 = vpop.f32.mrf.mxu0
        %518 = vmatprep.mubr.f32.mxu0 0.0
        %519 = vmatmul.mubr.f32.gmra.mxu0 %v370
        %v520 = vpop.f32.mrf.mxu0
        %v521 = vadd.f32 0.0, %v520
        %v522 = vpop.f32.mrf.mxu0
        %523 = vmatprep.mubr.f32.mxu0 0.0
        %524 = vmatmul.mubr.f32.gmra.mxu0 %v373
        %v525 = vpop.f32.mrf.mxu0
        %v526 = vadd.f32 0.0, %v525
        %v527 = vpop.f32.mrf.mxu0
        %528 = vmatprep.mubr.f32.mxu0 0.0
        %529 = vmatmul.mubr.f32.gmra.mxu0 %v376
        %v530 = vpop.f32.mrf.mxu0
        %v531 = vadd.f32 0.0, %v530
        %v532 = vpop.f32.mrf.mxu0
        %533 = vmatprep.mubr.f32.mxu0 0.0
        %534 = vmatmul.mubr.f32.gmra.mxu0 %v379
        %v535 = vpop.f32.mrf.mxu0
        %v536 = vadd.f32 0.0, %v535
        %v537 = vpop.f32.mrf.mxu0
        %538 = vdwg.mxu0
        %539 = vst [vmem:[#allocation2] sm:$0xff] %v496
        %540 = vst [vmem:[#allocation2 + $0x8] sm:$0xff] %v501
        %541 = vst [vmem:[#allocation2 + $0x10] sm:$0xff] %v506
        %542 = vst [vmem:[#allocation2 + $0x18] sm:$0xff] %v511
        %543 = vst [vmem:[#allocation2 + $0x20] sm:$0xff] %v516
        %544 = vst [vmem:[#allocation2 + $0x28] sm:$0xff] %v521
        %545 = vst [vmem:[#allocation2 + $0x30] sm:$0xff] %v526
        %546 = vst [vmem:[#allocation2 + $0x38] sm:$0xff] %v531
        %547 = vst [vmem:[#allocation2 + $0x40] sm:$0xff] %v536
        %v548 = vld [vmem:[#allocation2] sm:$0xff]
        %v549 = vld [vmem:[#allocation2 + $0x8] sm:$0xff]
        %v550 = vld [vmem:[#allocation2 + $0x10] sm:$0xff]
        %v551 = vld [vmem:[#allocation2 + $0x18] sm:$0xff]
        %v552 = vld [vmem:[#allocation2 + $0x20] sm:$0xff]
        %v553 = vld [vmem:[#allocation2 + $0x28] sm:$0xff]
        %v554 = vld [vmem:[#allocation2 + $0x30] sm:$0xff]
        %v555 = vld [vmem:[#allocation2 + $0x38] sm:$0xff]
        %v556 = vld [vmem:[#allocation2 + $0x40] sm:$0xff]
        %v557 = vld [vmem:[%s4] sm:$0xff]
        %v558 = vld [vmem:[%s4 + $0x8] sm:$0xff]
        %v559 = vld [vmem:[%s4 + $0x10] sm:$0xff]
        %v560 = vld [vmem:[%s4 + $0x18] sm:$0xff]
        %v561 = vld [vmem:[%s4 + $0x20] sm:$0xff]
        %v562 = vld [vmem:[%s4 + $0x28] sm:$0xff]
        %v563 = vld [vmem:[%s4 + $0x30] sm:$0xff]
        %v564 = vld [vmem:[%s4 + $0x38] sm:$0xff]
        %v565 = vld [vmem:[%s4 + $0x40] sm:$0xff]
        %567 = vset.pattern.permute.xlu0 0
        %568 = vperm.xlu0 %567, %v557
        %v569 = vpop.permute.xlu0 %568
        %572 = vset.pattern.permute.xlu0 0
        %573 = vperm.xlu0 %572, %v558
        %v574 = vpop.permute.xlu0 %573
        %577 = vset.pattern.permute.xlu0 0
        %578 = vperm.xlu0 %577, %v559
        %v579 = vpop.permute.xlu0 %578
        %582 = vset.pattern.permute.xlu0 0
        %583 = vperm.xlu0 %582, %v560
        %v584 = vpop.permute.xlu0 %583
        %587 = vset.pattern.permute.xlu0 0
        %588 = vperm.xlu0 %587, %v561
        %v589 = vpop.permute.xlu0 %588
        %592 = vset.pattern.permute.xlu0 0
        %593 = vperm.xlu0 %592, %v562
        %v594 = vpop.permute.xlu0 %593
        %597 = vset.pattern.permute.xlu0 0
        %598 = vperm.xlu0 %597, %v563
        %v599 = vpop.permute.xlu0 %598
        %602 = vset.pattern.permute.xlu0 0
        %603 = vperm.xlu0 %602, %v564
        %v604 = vpop.permute.xlu0 %603
        %607 = vset.pattern.permute.xlu0 0
        %608 = vperm.xlu0 %607, %v565
        %v609 = vpop.permute.xlu0 %608
        %v611 = vadd.f32 %v548, %v569
        %v612 = vadd.f32 %v549, %v574
        %v613 = vadd.f32 %v550, %v579
        %v614 = vadd.f32 %v551, %v584
        %v615 = vadd.f32 %v552, %v589
        %v616 = vadd.f32 %v553, %v594
        %v617 = vadd.f32 %v554, %v599
        %v618 = vadd.f32 %v555, %v604
        %v619 = vadd.f32 %v556, %v609
        %v620 = vtanh.pop %v611
        %v621 = vtanh.pop %v612
        %v622 = vtanh.pop %v613
        %v623 = vtanh.pop %v614
        %v624 = vtanh.pop %v615
        %v625 = vtanh.pop %v616
        %v626 = vtanh.pop %v617
        %v627 = vtanh.pop %v618
        %v628 = vtanh.pop %v619
        %629 = vst [vmem:[#allocation2] sm:$0xff] %v620
        %630 = vst [vmem:[#allocation2 + $0x8] sm:$0xff] %v621
        %631 = vst [vmem:[#allocation2 + $0x10] sm:$0xff] %v622
        %632 = vst [vmem:[#allocation2 + $0x18] sm:$0xff] %v623
        %633 = vst [vmem:[#allocation2 + $0x20] sm:$0xff] %v624
        %634 = vst [vmem:[#allocation2 + $0x28] sm:$0xff] %v625
        %635 = vst [vmem:[#allocation2 + $0x30] sm:$0xff] %v626
        %636 = vst [vmem:[#allocation2 + $0x38] sm:$0xff] %v627
        %637 = vst [vmem:[#allocation2 + $0x40] sm:$0xff] %v628
        %v638 = vld [vmem:[%s5] sm:$0xff]
        %v639 = vld [vmem:[%s319] sm:$0xff]
        %v640 = vld [vmem:[%s319 + $0x8] sm:$0xff]
        %v641 = vld [vmem:[%s319 + $0x10] sm:$0xff]
        %v642 = vld [vmem:[%s319 + $0x18] sm:$0xff]
        %v643 = vld [vmem:[%s319 + $0x20] sm:$0xff]
        %v644 = vld [vmem:[%s319 + $0x28] sm:$0xff]
        %v645 = vld [vmem:[%s319 + $0x30] sm:$0xff]
        %v646 = vld [vmem:[%s319 + $0x38] sm:$0xff]
        %v647 = vld [vmem:[%s319 + $0x40] sm:$0xff]
        %v648 = vld [vmem:[%s319 + $0x48] sm:$0xff]
        %v649 = vld [vmem:[%s319 + $0x50] sm:$0xff]
        %v650 = vld [vmem:[%s319 + $0x58] sm:$0xff]
        %v651 = vld [vmem:[%s319 + $0x60] sm:$0xff]
        %v652 = vld [vmem:[%s319 + $0x68] sm:$0xff]
        %v653 = vld [vmem:[%s319 + $0x70] sm:$0xff]
        %v654 = vld [vmem:[%s319 + $0x78] sm:$0xff]
        %vm655 = vcmask 64512
        %v657 = vsel %vm655, %v638, 0
        %v660 = vsel %vm655, %v639, 0
        %v663 = vsel %vm655, %v640, 0
        %v666 = vsel %vm655, %v641, 0
        %v669 = vsel %vm655, %v642, 0
        %v672 = vsel %vm655, %v643, 0
        %v675 = vsel %vm655, %v644, 0
        %v678 = vsel %vm655, %v645, 0
        %v681 = vsel %vm655, %v646, 0
        %v684 = vsel %vm655, %v647, 0
        %v687 = vsel %vm655, %v648, 0
        %v690 = vsel %vm655, %v649, 0
        %v693 = vsel %vm655, %v650, 0
        %v696 = vsel %vm655, %v651, 0
        %v699 = vsel %vm655, %v652, 0
        %v702 = vsel %vm655, %v653, 0
        %v705 = vsel %vm655, %v654, 0
        %707 = vmatprep.subr.mxu0 0.0
        %708 = vmatpush1.xpose.msra.mxu0 %v705
        %709 = vmatprep.subr.mxu0 0.0
        %710 = vmatpush1.xpose.msra.mxu0 %v702
        %711 = vmatprep.subr.mxu0 0.0
        %712 = vmatpush1.xpose.msra.mxu0 %v699
        %713 = vmatprep.subr.mxu0 0.0
        %714 = vmatpush1.xpose.msra.mxu0 %v696
        %715 = vmatprep.subr.mxu0 0.0
        %716 = vmatpush1.xpose.msra.mxu0 %v693
        %717 = vmatprep.subr.mxu0 0.0
        %718 = vmatpush1.xpose.msra.mxu0 %v690
        %719 = vmatprep.subr.mxu0 0.0
        %720 = vmatpush1.xpose.msra.mxu0 %v687
        %721 = vmatprep.subr.mxu0 0.0
        %722 = vmatpush1.xpose.msra.mxu0 %v684
        %723 = vmatprep.subr.mxu0 0.0
        %724 = vmatpush1.xpose.msra.mxu0 %v681
        %725 = vmatprep.subr.mxu0 0.0
        %726 = vmatpush1.xpose.msra.mxu0 %v678
        %727 = vmatprep.subr.mxu0 0.0
        %728 = vmatpush1.xpose.msra.mxu0 %v675
        %729 = vmatprep.subr.mxu0 0.0
        %730 = vmatpush1.xpose.msra.mxu0 %v672
        %731 = vmatprep.subr.mxu0 0.0
        %732 = vmatpush1.xpose.msra.mxu0 %v669
        %733 = vmatprep.subr.mxu0 0.0
        %734 = vmatpush1.xpose.msra.mxu0 %v666
        %735 = vmatprep.subr.mxu0 0.0
        %736 = vmatpush1.xpose.msra.mxu0 %v663
        %737 = vmatprep.subr.mxu0 0.0
        %738 = vmatpush1.xpose.msra.mxu0 %v660
        %739 = vmatprep.subr.mxu0 0.0
        %740 = vmatpush2.xpose.msra.mxu0 0.0
        %741 = vmatprep.subr.mxu0 0.0
        %742 = vmatpush2.xpose.msra.mxu0 0.0
        %743 = vmatprep.subr.mxu0 0.0
        %744 = vmatpush2.xpose.msra.mxu0 0.0
        %745 = vmatprep.subr.mxu0 0.0
        %746 = vmatpush2.xpose.msra.mxu0 0.0
        %747 = vmatprep.subr.mxu0 0.0
        %748 = vmatpush2.xpose.msra.mxu0 0.0
        %749 = vmatprep.subr.mxu0 0.0
        %750 = vmatpush2.xpose.msra.mxu0 0.0
        %751 = vmatprep.subr.mxu0 0.0
        %752 = vmatpush2.xpose.msra.mxu0 0.0
        %753 = vmatprep.subr.mxu0 0.0
        %754 = vmatpush2.xpose.msra.mxu0 0.0
        %755 = vmatprep.subr.mxu0 0.0
        %756 = vmatpush2.xpose.msra.mxu0 0.0
        %757 = vmatprep.subr.mxu0 0.0
        %758 = vmatpush2.xpose.msra.mxu0 0.0
        %759 = vmatprep.subr.mxu0 0.0
        %760 = vmatpush2.xpose.msra.mxu0 0.0
        %761 = vmatprep.subr.mxu0 0.0
        %762 = vmatpush2.xpose.msra.mxu0 0.0
        %763 = vmatprep.subr.mxu0 0.0
        %764 = vmatpush2.xpose.msra.mxu0 0.0
        %765 = vmatprep.subr.mxu0 0.0
        %766 = vmatpush2.xpose.msra.mxu0 0.0
        %767 = vmatprep.subr.mxu0 0.0
        %768 = vmatpush2.xpose.msra.mxu0 0.0
        %769 = vmatprep.subr.mxu0 0.0
        %770 = vmatpush2.xpose.msra.mxu0 0.0
        %771 = vmatprep.mubr.f32.mxu0 0.0
        %772 = vmatmul.mubr.f32.gmra.mxu0 %v657
        %v773 = vpop.f32.mrf.mxu0
        %v774 = vadd.f32 0.0, %v773
        %v775 = vpop.f32.mrf.mxu0
        %776 = vdwg.mxu0
        %v777 = vld [vmem:[%s327] sm:$0x1]
        %v778 = vrcp.pop %v777
        %v779 = vmul.f32 0.1125, %v778
        %v781 = vlaneseq
        %v782 = vshrl.u32 %v781, 7
        %v783 = vsub.s32 0, %v782
        %v784 = vrot.slane %v779, %v783
        %v786 = vmul.f32 %v774, %v784
        %787 = vst [vmem:[#allocation3] sm:$0xff] %v786
        %v788 = vld [vmem:[#allocation2 + $0x40] sm:$0xff]
        %789 = vst [vmem:[%s296] sm:$0xff] %v788
        %v790 = vld [vmem:[%s296] sm:$0xff]
        %v791 = vld [vmem:[#allocation2] sm:$0xff]
        %v792 = vld [vmem:[#allocation3] sm:$0x1]
        %v793 = vlaneseq
        %v794 = vshrl.u32 %v793, 7
        %v795 = vsub.s32 0, %v794
        %v796 = vrot.slane %v792, %v795
        %v797 = vmul.f32 %v791, %v796
        %v798 = vadd.f32 %v790, %v797
        %799 = vst [vmem:[%s296] sm:$0xff] %v798
        %v800 = vld [vmem:[%s296] sm:$0xff]
        %v801 = vld [vmem:[#allocation2 + $0x8] sm:$0xff]
        %v802 = vld [vmem:[#allocation3 + $0x1] sm:$0x1]
        %v803 = vlaneseq
        %v804 = vshrl.u32 %v803, 7
        %v805 = vsub.s32 0, %v804
        %v806 = vrot.slane %v802, %v805
        %v807 = vmul.f32 %v801, %v806
        %v808 = vadd.f32 %v800, %v807
        %809 = vst [vmem:[%s296] sm:$0xff] %v808
        %v810 = vld [vmem:[%s296] sm:$0xff]
        %v811 = vld [vmem:[#allocation2 + $0x10] sm:$0xff]
        %v812 = vld [vmem:[#allocation3 + $0x2] sm:$0x1]
        %v813 = vlaneseq
        %v814 = vshrl.u32 %v813, 7
        %v815 = vsub.s32 0, %v814
        %v816 = vrot.slane %v812, %v815
        %v817 = vmul.f32 %v811, %v816
        %v818 = vadd.f32 %v810, %v817
        %819 = vst [vmem:[%s296] sm:$0xff] %v818
        %v820 = vld [vmem:[%s296] sm:$0xff]
        %v821 = vld [vmem:[#allocation2 + $0x18] sm:$0xff]
        %v822 = vld [vmem:[#allocation3 + $0x3] sm:$0x1]
        %v823 = vlaneseq
        %v824 = vshrl.u32 %v823, 7
        %v825 = vsub.s32 0, %v824
        %v826 = vrot.slane %v822, %v825
        %v827 = vmul.f32 %v821, %v826
        %v828 = vadd.f32 %v820, %v827
        %829 = vst [vmem:[%s296] sm:$0xff] %v828
        %v830 = vld [vmem:[%s296] sm:$0xff]
        %v831 = vld [vmem:[#allocation2 + $0x20] sm:$0xff]
        %v832 = vld [vmem:[#allocation3 + $0x4] sm:$0x1]
        %v833 = vlaneseq
        %v834 = vshrl.u32 %v833, 7
        %v835 = vsub.s32 0, %v834
        %v836 = vrot.slane %v832, %v835
        %v837 = vmul.f32 %v831, %v836
        %v838 = vadd.f32 %v830, %v837
        %839 = vst [vmem:[%s296] sm:$0xff] %v838
        %v840 = vld [vmem:[%s296] sm:$0xff]
        %v841 = vld [vmem:[#allocation2 + $0x28] sm:$0xff]
        %v842 = vld [vmem:[#allocation3 + $0x5] sm:$0x1]
        %v843 = vlaneseq
        %v844 = vshrl.u32 %v843, 7
        %v845 = vsub.s32 0, %v844
        %v846 = vrot.slane %v842, %v845
        %v847 = vmul.f32 %v841, %v846
        %v848 = vadd.f32 %v840, %v847
        %849 = vst [vmem:[%s296] sm:$0xff] %v848
        %v850 = vld [vmem:[%s296] sm:$0xff]
        %v851 = vld [vmem:[#allocation2 + $0x30] sm:$0xff]
        %v852 = vld [vmem:[#allocation3 + $0x6] sm:$0x1]
        %v853 = vlaneseq
        %v854 = vshrl.u32 %v853, 7
        %v855 = vsub.s32 0, %v854
        %v856 = vrot.slane %v852, %v855
        %v857 = vmul.f32 %v851, %v856
        %v858 = vadd.f32 %v850, %v857
        %859 = vst [vmem:[%s296] sm:$0xff] %v858
        %v860 = vld [vmem:[%s296] sm:$0xff]
        %v861 = vld [vmem:[#allocation2 + $0x38] sm:$0xff]
        %v862 = vld [vmem:[#allocation3 + $0x7] sm:$0x1]
        %v863 = vlaneseq
        %v864 = vshrl.u32 %v863, 7
        %v865 = vsub.s32 0, %v864
        %v866 = vrot.slane %v862, %v865
        %v867 = vmul.f32 %v861, %v866
        %v868 = vadd.f32 %v860, %v867
        %869 = vst [vmem:[%s296] sm:$0xff] %v868
        %s870 = sand.u32 %s169, 1
        %s871 = scalar_lea.sflag [#allocation5], %s870
        %s872 = sand.u32 %s169, 1
        %s873 = smul.addr %s872, 8
        %s874 = scalar_lea.vmem [#allocation4], %s873
        // Predicated region
        $region45: #{tpu_custom_call.1} parent=43 // pred_check
          %p875 = pneg %p179
        $region46: #{tpu_custom_call.1} parent=43 // pred_check_branch
          %877 = sbr.rel (%p875) target = $region48
        $region47: #{tpu_custom_call.1} parent=43 // pred_region
          %s879 = ssub.s32 128, 128
          %880 = vsyncadd %s871, %s879
          %s881 = smul.addr %s20, 128
          %s882 = scalar_lea.hbm %s6, %s881
          %s884 = sshll.u32 %s874, 4
          %s885 = int_to_ptr.vmem [resolvable:$true] %s884
          %887 = dma.vmem_to_hbm [thread:$0]  %s885, 128, %s882, %s871
        $region48: #{tpu_custom_call.1} parent=43 // pred_fallthru
          _
      $region44: #{tpu_custom_call.1} parent=5 // pred_fallthru
        _
      %p888 = scmp.le.s32.totalorder 2, %s15
      // Predicated region
      $region49: #{tpu_custom_call.1} parent=5 // pred_check
        %p889 = pneg %p888
      $region50: #{tpu_custom_call.1} parent=5 // pred_check_branch
        %891 = sbr.rel (%p889) target = $region52
      $region51: #{tpu_custom_call.1} parent=5 // pred_region
        %s892 = ssub.s32 %s15, 2
        // Predicated region
        $region53: #{tpu_custom_call.1} parent=51 // pred_check
          %p893 = pneg %p185
        $region54: #{tpu_custom_call.1} parent=51 // pred_check_branch
          %895 = sbr.rel (%p893) target = $region56
        $region55: #{tpu_custom_call.1} parent=51 // pred_region
          %s896 = sand.u32 %s170, 1
          %s897 = scalar_lea.sflag [#allocation5], %s896
          %s898 = sand.u32 %s170, 1
          %s899 = smul.addr %s898, 8
          %s900 = scalar_lea.vmem [#allocation4], %s899
          %901 = dma.done %s897, 128
        $region56: #{tpu_custom_call.1} parent=51 // pred_fallthru
          _
      $region52: #{tpu_custom_call.1} parent=5 // pred_fallthru
        _
    $region6: #{tpu_custom_call.1} parent=1 // loop_footer
      %s19 = sadd.s32 1, %s15
    $region7: #{tpu_custom_call.1} parent=1 // loop_footer_branch
      %14 = sbr.rel target = $region3
    $region8: #{tpu_custom_call.1} parent=1 // loop_exit
      _
    %902 = vsyncpa [#allocation5], 1
    %s903 = scalar_lea.sflag [#allocation5], 1
    %904 = vsyncpa %s903, 1

</llo_original>
